<compile_context>
chip_gen: v6e
topology: v6e:2x2x1
jax: 0.10.0
libtpu: 0.0.40
codegen_flags: <defaults>
</compile_context>

<pallas_src>
import functools

import jax
import jax.numpy as jnp
from jax.experimental import pallas as pl
from jax.experimental.pallas import tpu as pltpu  # noqa: F401  (TPU backend)


def _round_up(n, m=128):
    return ((n + m - 1) // m) * m


def _fused_mlp_kernel(*refs, n_layers: int):
    """refs = (x, w0, b0, w1, b1, ..., w_{L-1}, b_{L-1}, out).

    x, w_i are bf16; b_i and out are f32.  All matmuls accumulate in f32 on the
    MXU; bias add and ReLU run in f32 on the VPU; intermediates stay in vregs.
    """
    x_ref = refs[0]
    o_ref = refs[1 + 2 * n_layers]

    h = x_ref[...]  # bf16 [B, Din_pad]
    acc = None
    for i in range(n_layers):
        w_ref = refs[1 + 2 * i]
        b_ref = refs[2 + 2 * i]
        acc = jnp.dot(h, w_ref[...], preferred_element_type=jnp.float32)
        acc = acc + b_ref[...]            # f32 bias, broadcast over batch
        if i < n_layers - 1:
            acc = jnp.maximum(acc, 0.0)   # fused ReLU (f32)
            h = acc.astype(jnp.bfloat16)  # bf16 only for the next MXU matmul
    o_ref[...] = acc.astype(o_ref.dtype)  # single lane-dense f32 store


def _fused_mlp_pallas(x2d, params):
    """x2d: [B, Din_pad] bf16; params: tuple of (w_bf16 [Kp, Np], b_f32 [1, Np])."""
    n_layers = len(params)
    B, din_pad = x2d.shape
    dout_pad = params[-1][0].shape[1]

    inputs = [x2d]
    in_specs = [pl.BlockSpec((B, din_pad), lambda: (0, 0))]
    flops = 0
    bytes_accessed = x2d.size * x2d.dtype.itemsize
    for w, b in params:
        inputs += [w, b]
        in_specs += [
            pl.BlockSpec(w.shape, lambda: (0, 0)),
            pl.BlockSpec(b.shape, lambda: (0, 0)),
        ]
        flops += 2 * B * w.shape[0] * w.shape[1]
        bytes_accessed += w.size * w.dtype.itemsize + b.size * b.dtype.itemsize
    bytes_accessed += B * dout_pad * 4  # final f32 store

    kernel = functools.partial(_fused_mlp_kernel, n_layers=n_layers)
    return pl.pallas_call(
        kernel,
        out_shape=jax.ShapeDtypeStruct((B, dout_pad), jnp.float32),
        in_specs=in_specs,
        out_specs=pl.BlockSpec((B, dout_pad), lambda: (0, 0)),
        cost_estimate=pl.CostEstimate(
            flops=flops, transcendentals=0, bytes_accessed=bytes_accessed
        ),
    )(*inputs)


@functools.partial(jax.jit, static_argnames=("d_out",))
def linearnet_forward(x, params, *, d_out):
    """Full forward: flatten (NCHW -> [B, D_in]) -> fused MLP -> slice to D_out."""
    B = x.shape[0]
    h = x.reshape(B, -1)                       # torch.flatten(x, 1)
    din = h.shape[1]
    din_pad = params[0][0].shape[0]
    if din_pad != din:                         # zero-pad features to 128 lanes
        h = jnp.pad(h, ((0, 0), (0, din_pad - din)))
    h = h.astype(jnp.bfloat16)                 # bf16 matmul inputs (f32 accumulate)
    out_pad = _fused_mlp_pallas(h, params)     # [B, Dout_pad] f32
    return out_pad[:, :d_out]


class LinearNetPallas:
    """JAX/Pallas equivalent of the PyTorch LinearNet module."""

    def __init__(self, D_in, H, D_out, key):
        self.D_in = int(D_in)
        self.D_out = int(D_out)
        self.dim_seq = [int(D_in)] + [int(h) for h in H] + [int(D_out)]

        self.params_f32 = []   # unpadded f32 weights as [in, out] (PyTorch W^T)
        padded = []
        for idx in range(len(self.dim_seq) - 1):
            d1 = self.dim_seq[idx]
            d2 = self.dim_seq[idx + 1]
            key, kw, kb = jax.random.split(key, 3)
            # PyTorch Linear default init: U(-1/sqrt(fan_in), 1/sqrt(fan_in))
            bound = 1.0 / (d1 ** 0.5)
            w = jax.random.uniform(kw, (d1, d2), jnp.float32, -bound, bound)
            b = jax.random.uniform(kb, (d2,), jnp.float32, -bound, bound)
            self.params_f32.append((w, b))

            # Zero-pad to lane-dense shapes; padded rows/cols contribute exactly 0.
            d1p, d2p = _round_up(d1), _round_up(d2)
            wp = jnp.zeros((d1p, d2p), jnp.float32).at[:d1, :d2].set(w)
            bp = jnp.zeros((1, d2p), jnp.float32).at[0, :d2].set(b)
            padded.append((wp.astype(jnp.bfloat16), bp))
        self.params_padded = tuple(padded)

    def __call__(self, x):
        return linearnet_forward(x, self.params_padded, d_out=self.D_out)


if __name__ == "__main__":
    key = jax.random.PRNGKey(0)
    k_in, k_params = jax.random.split(key)

    # Input: NCHW [2, 4, 16, 16] -> D_in = 4*16*16 = 1024
    B, C, Hs, Ws = 2, 4, 16, 16
    D_in = C * Hs * Ws
    H_dims = [32, 32]
    D_out = 8

    x = jax.random.normal(k_in, (B, C, Hs, Ws), dtype=jnp.float32)

    model = LinearNetPallas(D_in, H_dims, D_out, k_params)
    y = jax.block_until_ready(model(x))
    assert y.shape == (B, D_out)

    # Reference 1: plain JAX mirroring the bf16-matmul / f32-accumulate recipe.
    ref = x.reshape(B, -1)
    n_layers = len(model.params_f32)
    for i, (w, b) in enumerate(model.params_f32):
        acc = jnp.dot(
            ref.astype(jnp.bfloat16), w.astype(jnp.bfloat16),
            preferred_element_type=jnp.float32,
        ) + b
        if i < n_layers - 1:
            acc = jnp.maximum(acc, 0.0)
        ref = acc
    assert jnp.allclose(y, ref, atol=1e-2, rtol=1e-2), float(jnp.max(jnp.abs(y - ref)))

    # Reference 2: pure-f32 math, loose tolerance (bf16 matmul inputs only).
    ref32 = x.reshape(B, -1)
    for i, (w, b) in enumerate(model.params_f32):
        ref32 = ref32 @ w + b
        if i < n_layers - 1:
            ref32 = jnp.maximum(ref32, 0.0)
    assert jnp.allclose(y, ref32, atol=5e-2, rtol=5e-2)

    print("KERNEL_OK")
</pallas_src>

<mosaic_0001>
module attributes {stable_mosaic.version = 11 : i64} {
  func.func @_fused_mlp_kernel(%arg0: memref<2x1024xbf16, #tpu.memory_space<vmem>>, %arg1: memref<1024x128xbf16, #tpu.memory_space<vmem>>, %arg2: memref<1x128xf32, #tpu.memory_space<vmem>>, %arg3: memref<128x128xbf16, #tpu.memory_space<vmem>>, %arg4: memref<1x128xf32, #tpu.memory_space<vmem>>, %arg5: memref<128x128xbf16, #tpu.memory_space<vmem>>, %arg6: memref<1x128xf32, #tpu.memory_space<vmem>>, %arg7: memref<2x128xf32, #tpu.memory_space<vmem>>) attributes {dimension_semantics = [], scalar_prefetch = 0 : i64, scratch_operands = 0 : i64, tpu.core_type = #tpu.core_type<tc>} {
    %c0 = arith.constant 0 : index
    %c0_0 = arith.constant 0 : index
    %0 = vector.load %arg0[%c0, %c0_0] : memref<2x1024xbf16, #tpu.memory_space<vmem>>, vector<2x1024xbf16>
    %c0_1 = arith.constant 0 : index
    %c0_2 = arith.constant 0 : index
    %1 = vector.load %arg1[%c0_1, %c0_2] : memref<1024x128xbf16, #tpu.memory_space<vmem>>, vector<1024x128xbf16>
    %cst = arith.constant dense<0.000000e+00> : vector<2x128xf32>
    %2 = tpu.matmul %0, %1, %cst {dimension_numbers = #tpu.dot_dimension_numbers<[1], [0], [0], [1], [0, 0, 1, 1], [], []>} : vector<2x1024xbf16>, vector<1024x128xbf16>, vector<2x128xf32> -> vector<2x128xf32>
    %c0_3 = arith.constant 0 : index
    %c0_4 = arith.constant 0 : index
    %3 = vector.load %arg2[%c0_3, %c0_4] : memref<1x128xf32, #tpu.memory_space<vmem>>, vector<1x128xf32>
    %4 = vector.broadcast %3 : vector<1x128xf32> to vector<2x128xf32>
    %5 = arith.addf %2, %4 : vector<2x128xf32>
    %cst_5 = arith.constant 0.000000e+00 : f32
    %6 = vector.broadcast %cst_5 : f32 to vector<2x128xf32>
    %7 = arith.maximumf %5, %6 : vector<2x128xf32>
    %8 = arith.truncf %7 : vector<2x128xf32> to vector<2x128xbf16>
    %c0_6 = arith.constant 0 : index
    %c0_7 = arith.constant 0 : index
    %9 = vector.load %arg3[%c0_6, %c0_7] : memref<128x128xbf16, #tpu.memory_space<vmem>>, vector<128x128xbf16>
    %cst_8 = arith.constant dense<0.000000e+00> : vector<2x128xf32>
    %10 = tpu.matmul %8, %9, %cst_8 {dimension_numbers = #tpu.dot_dimension_numbers<[1], [0], [0], [1], [0, 0, 1, 1], [], []>} : vector<2x128xbf16>, vector<128x128xbf16>, vector<2x128xf32> -> vector<2x128xf32>
    %c0_9 = arith.constant 0 : index
    %c0_10 = arith.constant 0 : index
    %11 = vector.load %arg4[%c0_9, %c0_10] : memref<1x128xf32, #tpu.memory_space<vmem>>, vector<1x128xf32>
    %12 = vector.broadcast %11 : vector<1x128xf32> to vector<2x128xf32>
    %13 = arith.addf %10, %12 : vector<2x128xf32>
    %cst_11 = arith.constant 0.000000e+00 : f32
    %14 = vector.broadcast %cst_11 : f32 to vector<2x128xf32>
    %15 = arith.maximumf %13, %14 : vector<2x128xf32>
    %16 = arith.truncf %15 : vector<2x128xf32> to vector<2x128xbf16>
    %c0_12 = arith.constant 0 : index
    %c0_13 = arith.constant 0 : index
    %17 = vector.load %arg5[%c0_12, %c0_13] : memref<128x128xbf16, #tpu.memory_space<vmem>>, vector<128x128xbf16>
    %cst_14 = arith.constant dense<0.000000e+00> : vector<2x128xf32>
    %18 = tpu.matmul %16, %17, %cst_14 {dimension_numbers = #tpu.dot_dimension_numbers<[1], [0], [0], [1], [0, 0, 1, 1], [], []>} : vector<2x128xbf16>, vector<128x128xbf16>, vector<2x128xf32> -> vector<2x128xf32>
    %c0_15 = arith.constant 0 : index
    %c0_16 = arith.constant 0 : index
    %19 = vector.load %arg6[%c0_15, %c0_16] : memref<1x128xf32, #tpu.memory_space<vmem>>, vector<1x128xf32>
    %20 = vector.broadcast %19 : vector<1x128xf32> to vector<2x128xf32>
    %21 = arith.addf %18, %20 : vector<2x128xf32>
    %c0_17 = arith.constant 0 : index
    %c0_18 = arith.constant 0 : index
    %22 = vector.load %arg7[%c0_17, %c0_18] : memref<2x128xf32, #tpu.memory_space<vmem>>, vector<2x128xf32>
    tpu.vector_store %arg7[%c0_17, %c0_18], %21 {strides = array<i32>} : memref<2x128xf32, #tpu.memory_space<vmem>>, vector<2x128xf32>,
    return
  }
}

</mosaic_0001>

<llo_original>
// kernel: linearnet_forward.1
$region0: #{linearnet_forward.1}
  #allocation0 [shape = 'u32[]', space=smem, size = 0x4, offset = 0x4, fixed_abs, tag = 'smem constant byte address 0x4 - core index']
  #allocation1 [shape = 'u32[144,128]{1,0:T(1,128)}', space=vmem, size = 0x12000, scoped, tag = 'internal scratch']
  %s0 = inlined_call_operand.vmem [shape: bf16[2,1024], index: 0, kind: input, shape index: {}]
  %s1 = inlined_call_operand.hbm [shape: bf16[1024,128], index: 1, kind: input, shape index: {}]
  %s2 = inlined_call_operand.vmem [shape: f32[1,128], index: 2, kind: input, shape index: {}]
  %s3 = inlined_call_operand.vmem [shape: bf16[128,128], index: 3, kind: input, shape index: {}]
  %s4 = inlined_call_operand.vmem [shape: f32[1,128], index: 4, kind: input, shape index: {}]
  %s5 = inlined_call_operand.vmem [shape: bf16[128,128], index: 5, kind: input, shape index: {}]
  %s6 = inlined_call_operand.vmem [shape: f32[1,128], index: 6, kind: input, shape index: {}]
  %s7 = inlined_call_operand.hbm [shape: f32[2,128], index: 7, kind: output, shape index: {}]
  %s8 = sld [smem:[#allocation0]]
  $region42: #{linearnet_forward.1} parent=0
    _
  %s10 = ssub.s32 1, %s8
  %s11 = scalar_select 0, %s10, %s8
  $region1: #{linearnet_forward.1} parent=0
    #allocation2 [shape = 'u8[262144]{0}', space=vmem, size = 0x40000, scoped, tag = 'input window, operand 1, single buffered']
    #allocation3 [shape = 's32[1]{0}', space=sflag, size = 0x4, scoped, tag = 'scoped memory for linearnet_forward.1']
    #allocation4 [shape = 's32[1]{0}', space=sflag, size = 0x4, scoped, tag = 'scoped memory for linearnet_forward.1']
    #allocation5 [shape = 'u8[1024]{0}', space=vmem, size = 0x400, scoped, tag = 'output window, operand 0, single buffered']
    %12 = vsyncpa [#allocation3], 0
    %13 = vsyncpa [#allocation4], 0
    // Predicated region
    $region2: #{linearnet_forward.1} parent=1 // pred_check
      _
    $region3: #{linearnet_forward.1} parent=1 // pred_check_branch
      %15 = sbr.rel (0) target = $region5
    $region4: #{linearnet_forward.1} parent=1 // pred_region
      _
    $region5: #{linearnet_forward.1} parent=1 // pred_fallthru
      _
    // Predicated region
    $region6: #{linearnet_forward.1} parent=1 // pred_check
      _
    $region7: #{linearnet_forward.1} parent=1 // pred_check_branch
      %17 = sbr.rel (0) target = $region9
    $region8: #{linearnet_forward.1} parent=1 // pred_region
      %s19 = ssub.s32 8192, 8192
      %20 = vsyncadd [#allocation3], %s19
      %s21 = sshll.u32 [#allocation2], 4
      %s22 = int_to_ptr.vmem [resolvable:$true] %s21
      %27 = dma.hbm_to_vmem [thread:$0]  %s1, 8192, %s22, [#allocation3], 64, 64, 4
    $region9: #{linearnet_forward.1} parent=1 // pred_fallthru
      _
    // Predicated region
    $region10: #{linearnet_forward.1} parent=1 // pred_check
      _
    $region11: #{linearnet_forward.1} parent=1 // pred_check_branch
      %29 = sbr.rel (0) target = $region13
    $region12: #{linearnet_forward.1} parent=1 // pred_region
      _
    $region13: #{linearnet_forward.1} parent=1 // pred_fallthru
      _
    // Predicated region
    $region14: #{linearnet_forward.1} parent=1 // pred_check
      _
    $region15: #{linearnet_forward.1} parent=1 // pred_check_branch
      %31 = sbr.rel (0) target = $region17
    $region16: #{linearnet_forward.1} parent=1 // pred_region
      _
    $region17: #{linearnet_forward.1} parent=1 // pred_fallthru
      _
    // Predicated region
    $region18: #{linearnet_forward.1} parent=1 // pred_check
      _
    $region19: #{linearnet_forward.1} parent=1 // pred_check_branch
      %33 = sbr.rel (0) target = $region21
    $region20: #{linearnet_forward.1} parent=1 // pred_region
      _
    $region21: #{linearnet_forward.1} parent=1 // pred_fallthru
      _
    // Predicated region
    $region22: #{linearnet_forward.1} parent=1 // pred_check
      _
    $region23: #{linearnet_forward.1} parent=1 // pred_check_branch
      %35 = sbr.rel (0) target = $region25
    $region24: #{linearnet_forward.1} parent=1 // pred_region
      _
    $region25: #{linearnet_forward.1} parent=1 // pred_fallthru
      _
    // Predicated region
    $region26: #{linearnet_forward.1} parent=1 // pred_check
      _
    $region27: #{linearnet_forward.1} parent=1 // pred_check_branch
      %37 = sbr.rel (0) target = $region29
    $region28: #{linearnet_forward.1} parent=1 // pred_region
      _
    $region29: #{linearnet_forward.1} parent=1 // pred_fallthru
      _
    // Predicated region
    $region30: #{linearnet_forward.1} parent=1 // pred_check
      _
    $region31: #{linearnet_forward.1} parent=1 // pred_check_branch
      %39 = sbr.rel (0) target = $region33
    $region32: #{linearnet_forward.1} parent=1 // pred_region
      %40 = dma.done [#allocation3], 8192
    $region33: #{linearnet_forward.1} parent=1 // pred_fallthru
      _
    %v42 = vld [vmem:[%s0] sm:$0xff]
    %v43 = vld [vmem:[#allocation2] sm:$0xf]
    %v44 = vld [vmem:[#allocation2 + $0x4] sm:$0xf]
    %v45 = vld [vmem:[#allocation2 + $0x8] sm:$0xf]
    %v46 = vld [vmem:[#allocation2 + $0xc] sm:$0xf]
    %v47 = vld [vmem:[#allocation2 + $0x10] sm:$0xf]
    %v48 = vld [vmem:[#allocation2 + $0x14] sm:$0xf]
    %v49 = vld [vmem:[#allocation2 + $0x18] sm:$0xf]
    %v50 = vld [vmem:[#allocation2 + $0x1c] sm:$0xf]
    %v51 = vld [vmem:[#allocation2 + $0x20] sm:$0xf]
    %v52 = vld [vmem:[#allocation2 + $0x24] sm:$0xf]
    %v53 = vld [vmem:[#allocation2 + $0x28] sm:$0xf]
    %v54 = vld [vmem:[#allocation2 + $0x2c] sm:$0xf]
    %v55 = vld [vmem:[#allocation2 + $0x30] sm:$0xf]
    %v56 = vld [vmem:[#allocation2 + $0x34] sm:$0xf]
    %v57 = vld [vmem:[#allocation2 + $0x38] sm:$0xf]
    %v58 = vld [vmem:[#allocation2 + $0x3c] sm:$0xf]
    %v59 = vld [vmem:[#allocation2 + $0x40] sm:$0xf]
    %v60 = vld [vmem:[#allocation2 + $0x44] sm:$0xf]
    %v61 = vld [vmem:[#allocation2 + $0x48] sm:$0xf]
    %v62 = vld [vmem:[#allocation2 + $0x4c] sm:$0xf]
    %v63 = vld [vmem:[#allocation2 + $0x50] sm:$0xf]
    %v64 = vld [vmem:[#allocation2 + $0x54] sm:$0xf]
    %v65 = vld [vmem:[#allocation2 + $0x58] sm:$0xf]
    %v66 = vld [vmem:[#allocation2 + $0x5c] sm:$0xf]
    %v67 = vld [vmem:[#allocation2 + $0x60] sm:$0xf]
    %v68 = vld [vmem:[#allocation2 + $0x64] sm:$0xf]
    %v69 = vld [vmem:[#allocation2 + $0x68] sm:$0xf]
    %v70 = vld [vmem:[#allocation2 + $0x6c] sm:$0xf]
    %v71 = vld [vmem:[#allocation2 + $0x70] sm:$0xf]
    %v72 = vld [vmem:[#allocation2 + $0x74] sm:$0xf]
    %v73 = vld [vmem:[#allocation2 + $0x78] sm:$0xf]
    %v74 = vld [vmem:[#allocation2 + $0x7c] sm:$0xf]
    %v75 = vld [vmem:[#allocation2 + $0x80] sm:$0xf]
    %v76 = vld [vmem:[#allocation2 + $0x84] sm:$0xf]
    %v77 = vld [vmem:[#allocation2 + $0x88] sm:$0xf]
    %v78 = vld [vmem:[#allocation2 + $0x8c] sm:$0xf]
    %v79 = vld [vmem:[#allocation2 + $0x90] sm:$0xf]
    %v80 = vld [vmem:[#allocation2 + $0x94] sm:$0xf]
    %v81 = vld [vmem:[#allocation2 + $0x98] sm:$0xf]
    %v82 = vld [vmem:[#allocation2 + $0x9c] sm:$0xf]
    %v83 = vld [vmem:[#allocation2 + $0xa0] sm:$0xf]
    %v84 = vld [vmem:[#allocation2 + $0xa4] sm:$0xf]
    %v85 = vld [vmem:[#allocation2 + $0xa8] sm:$0xf]
    %v86 = vld [vmem:[#allocation2 + $0xac] sm:$0xf]
    %v87 = vld [vmem:[#allocation2 + $0xb0] sm:$0xf]
    %v88 = vld [vmem:[#allocation2 + $0xb4] sm:$0xf]
    %v89 = vld [vmem:[#allocation2 + $0xb8] sm:$0xf]
    %v90 = vld [vmem:[#allocation2 + $0xbc] sm:$0xf]
    %v91 = vld [vmem:[#allocation2 + $0xc0] sm:$0xf]
    %v92 = vld [vmem:[#allocation2 + $0xc4] sm:$0xf]
    %v93 = vld [vmem:[#allocation2 + $0xc8] sm:$0xf]
    %v94 = vld [vmem:[#allocation2 + $0xcc] sm:$0xf]
    %v95 = vld [vmem:[#allocation2 + $0xd0] sm:$0xf]
    %v96 = vld [vmem:[#allocation2 + $0xd4] sm:$0xf]
    %v97 = vld [vmem:[#allocation2 + $0xd8] sm:$0xf]
    %v98 = vld [vmem:[#allocation2 + $0xdc] sm:$0xf]
    %v99 = vld [vmem:[#allocation2 + $0xe0] sm:$0xf]
    %v100 = vld [vmem:[#allocation2 + $0xe4] sm:$0xf]
    %v101 = vld [vmem:[#allocation2 + $0xe8] sm:$0xf]
    %v102 = vld [vmem:[#allocation2 + $0xec] sm:$0xf]
    %v103 = vld [vmem:[#allocation2 + $0xf0] sm:$0xf]
    %v104 = vld [vmem:[#allocation2 + $0xf4] sm:$0xf]
    %v105 = vld [vmem:[#allocation2 + $0xf8] sm:$0xf]
    %v106 = vld [vmem:[#allocation2 + $0xfc] sm:$0xf]
    %v107 = vld [vmem:[#allocation2 + $0x100] sm:$0xf]
    %v108 = vld [vmem:[#allocation2 + $0x104] sm:$0xf]
    %v109 = vld [vmem:[#allocation2 + $0x108] sm:$0xf]
    %v110 = vld [vmem:[#allocation2 + $0x10c] sm:$0xf]
    %v111 = vld [vmem:[#allocation2 + $0x110] sm:$0xf]
    %v112 = vld [vmem:[#allocation2 + $0x114] sm:$0xf]
    %v113 = vld [vmem:[#allocation2 + $0x118] sm:$0xf]
    %v114 = vld [vmem:[#allocation2 + $0x11c] sm:$0xf]
    %v115 = vld [vmem:[#allocation2 + $0x120] sm:$0xf]
    %v116 = vld [vmem:[#allocation2 + $0x124] sm:$0xf]
    %v117 = vld [vmem:[#allocation2 + $0x128] sm:$0xf]
    %v118 = vld [vmem:[#allocation2 + $0x12c] sm:$0xf]
    %v119 = vld [vmem:[#allocation2 + $0x130] sm:$0xf]
    %v120 = vld [vmem:[#allocation2 + $0x134] sm:$0xf]
    %v121 = vld [vmem:[#allocation2 + $0x138] sm:$0xf]
    %v122 = vld [vmem:[#allocation2 + $0x13c] sm:$0xf]
    %v123 = vld [vmem:[#allocation2 + $0x140] sm:$0xf]
    %v124 = vld [vmem:[#allocation2 + $0x144] sm:$0xf]
    %v125 = vld [vmem:[#allocation2 + $0x148] sm:$0xf]
    %v126 = vld [vmem:[#allocation2 + $0x14c] sm:$0xf]
    %v127 = vld [vmem:[#allocation2 + $0x150] sm:$0xf]
    %v128 = vld [vmem:[#allocation2 + $0x154] sm:$0xf]
    %v129 = vld [vmem:[#allocation2 + $0x158] sm:$0xf]
    %v130 = vld [vmem:[#allocation2 + $0x15c] sm:$0xf]
    %v131 = vld [vmem:[#allocation2 + $0x160] sm:$0xf]
    %v132 = vld [vmem:[#allocation2 + $0x164] sm:$0xf]
    %v133 = vld [vmem:[#allocation2 + $0x168] sm:$0xf]
    %v134 = vld [vmem:[#allocation2 + $0x16c] sm:$0xf]
    %v135 = vld [vmem:[#allocation2 + $0x170] sm:$0xf]
    %v136 = vld [vmem:[#allocation2 + $0x174] sm:$0xf]
    %v137 = vld [vmem:[#allocation2 + $0x178] sm:$0xf]
    %v138 = vld [vmem:[#allocation2 + $0x17c] sm:$0xf]
    %v139 = vld [vmem:[#allocation2 + $0x180] sm:$0xf]
    %v140 = vld [vmem:[#allocation2 + $0x184] sm:$0xf]
    %v141 = vld [vmem:[#allocation2 + $0x188] sm:$0xf]
    %v142 = vld [vmem:[#allocation2 + $0x18c] sm:$0xf]
    %v143 = vld [vmem:[#allocation2 + $0x190] sm:$0xf]
    %v144 = vld [vmem:[#allocation2 + $0x194] sm:$0xf]
    %v145 = vld [vmem:[#allocation2 + $0x198] sm:$0xf]
    %v146 = vld [vmem:[#allocation2 + $0x19c] sm:$0xf]
    %v147 = vld [vmem:[#allocation2 + $0x1a0] sm:$0xf]
    %v148 = vld [vmem:[#allocation2 + $0x1a4] sm:$0xf]
    %v149 = vld [vmem:[#allocation2 + $0x1a8] sm:$0xf]
    %v150 = vld [vmem:[#allocation2 + $0x1ac] sm:$0xf]
    %v151 = vld [vmem:[#allocation2 + $0x1b0] sm:$0xf]
    %v152 = vld [vmem:[#allocation2 + $0x1b4] sm:$0xf]
    %v153 = vld [vmem:[#allocation2 + $0x1b8] sm:$0xf]
    %v154 = vld [vmem:[#allocation2 + $0x1bc] sm:$0xf]
    %v155 = vld [vmem:[#allocation2 + $0x1c0] sm:$0xf]
    %v156 = vld [vmem:[#allocation2 + $0x1c4] sm:$0xf]
    %v157 = vld [vmem:[#allocation2 + $0x1c8] sm:$0xf]
    %v158 = vld [vmem:[#allocation2 + $0x1cc] sm:$0xf]
    %v159 = vld [vmem:[#allocation2 + $0x1d0] sm:$0xf]
    %v160 = vld [vmem:[#allocation2 + $0x1d4] sm:$0xf]
    %v161 = vld [vmem:[#allocation2 + $0x1d8] sm:$0xf]
    %v162 = vld [vmem:[#allocation2 + $0x1dc] sm:$0xf]
    %v163 = vld [vmem:[#allocation2 + $0x1e0] sm:$0xf]
    %v164 = vld [vmem:[#allocation2 + $0x1e4] sm:$0xf]
    %v165 = vld [vmem:[#allocation2 + $0x1e8] sm:$0xf]
    %v166 = vld [vmem:[#allocation2 + $0x1ec] sm:$0xf]
    %v167 = vld [vmem:[#allocation2 + $0x1f0] sm:$0xf]
    %v168 = vld [vmem:[#allocation2 + $0x1f4] sm:$0xf]
    %v169 = vld [vmem:[#allocation2 + $0x1f8] sm:$0xf]
    %v170 = vld [vmem:[#allocation2 + $0x1fc] sm:$0xf]
    %v171 = vld [vmem:[%s2] sm:$0x1]
    %v173 = vlaneseq
    %v174 = vshrl.u32 %v173, 7
    %v175 = vsub.s32 0, %v174
    %v176 = vrot.slane %v171, %v175
    %v179 = vcombine.high %v42, %v42
    %v181 = vunpack.c.l.s4 1966171168
    %v182 = vunpack.c.0.s8 %v181
    %v183 = vlaneseq
    %v184 = vshrl.u32 %v183, 7
    %v185 = vsub.s32 %v182, %v184
    %v186 = vrot.slane %v42, %v185
    %v188 = vunpack.c.l.s4 1966171168
    %v189 = vunpack.c.0.s8 %v188
    %v190 = vlaneseq
    %v191 = vshrl.u32 %v190, 7
    %v192 = vsub.s32 %v189, %v191
    %v193 = vrot.slane %v179, %v192
    %v194 = vcombine.high %v186, %v186
    %v195 = vcombine.high %v193, %v193
    %v197 = vunpack.c.l.s4 1966171168
    %v198 = vunpack.c.0.s8 %v197
    %v199 = vlaneseq
    %v200 = vshrl.u32 %v199, 7
    %v201 = vsub.s32 %v198, %v200
    %v202 = vrot.slane %v186, %v201
    %v204 = vunpack.c.l.s4 1966171168
    %v205 = vunpack.c.0.s8 %v204
    %v206 = vlaneseq
    %v207 = vshrl.u32 %v206, 7
    %v208 = vsub.s32 %v205, %v207
    %v209 = vrot.slane %v193, %v208
    %v211 = vunpack.c.l.s4 1966171168
    %v212 = vunpack.c.0.s8 %v211
    %v213 = vlaneseq
    %v214 = vshrl.u32 %v213, 7
    %v215 = vsub.s32 %v212, %v214
    %v216 = vrot.slane %v194, %v215
    %v218 = vunpack.c.l.s4 1966171168
    %v219 = vunpack.c.0.s8 %v218
    %v220 = vlaneseq
    %v221 = vshrl.u32 %v220, 7
    %v222 = vsub.s32 %v219, %v221
    %v223 = vrot.slane %v195, %v222
    %v224 = vcombine.high %v202, %v202
    %v225 = vcombine.high %v209, %v209
    %v226 = vcombine.high %v216, %v216
    %v227 = vcombine.high %v223, %v223
    %v364 = vunpack.c.l.b16 %v43
    %v365 = vunpack.c.l.b16 %v44
    %v366 = vunpack.c.l.b16 %v45
    %v367 = vunpack.c.l.b16 %v46
    %v368 = vunpack.c.l.b16 %v47
    %v369 = vunpack.c.l.b16 %v48
    %v370 = vunpack.c.l.b16 %v49
    %v371 = vunpack.c.l.b16 %v50
    %v372 = vunpack.c.l.b16 %v51
    %v373 = vunpack.c.l.b16 %v52
    %v374 = vunpack.c.l.b16 %v53
    %v375 = vunpack.c.l.b16 %v54
    %v376 = vunpack.c.l.b16 %v55
    %v377 = vunpack.c.l.b16 %v56
    %v378 = vunpack.c.l.b16 %v57
    %v379 = vunpack.c.l.b16 %v58
    %v380 = vunpack.c.l.b16 %v59
    %v381 = vunpack.c.l.b16 %v60
    %v382 = vunpack.c.l.b16 %v61
    %v383 = vunpack.c.l.b16 %v62
    %v384 = vunpack.c.l.b16 %v63
    %v385 = vunpack.c.l.b16 %v64
    %v386 = vunpack.c.l.b16 %v65
    %v387 = vunpack.c.l.b16 %v66
    %v388 = vunpack.c.l.b16 %v67
    %v389 = vunpack.c.l.b16 %v68
    %v390 = vunpack.c.l.b16 %v69
    %v391 = vunpack.c.l.b16 %v70
    %v392 = vunpack.c.l.b16 %v71
    %v393 = vunpack.c.l.b16 %v72
    %v394 = vunpack.c.l.b16 %v73
    %v395 = vunpack.c.l.b16 %v74
    %v396 = vunpack.c.l.b16 %v75
    %v397 = vunpack.c.l.b16 %v76
    %v398 = vunpack.c.l.b16 %v77
    %v399 = vunpack.c.l.b16 %v78
    %v400 = vunpack.c.l.b16 %v79
    %v401 = vunpack.c.l.b16 %v80
    %v402 = vunpack.c.l.b16 %v81
    %v403 = vunpack.c.l.b16 %v82
    %v404 = vunpack.c.l.b16 %v83
    %v405 = vunpack.c.l.b16 %v84
    %v406 = vunpack.c.l.b16 %v85
    %v407 = vunpack.c.l.b16 %v86
    %v408 = vunpack.c.l.b16 %v87
    %v409 = vunpack.c.l.b16 %v88
    %v410 = vunpack.c.l.b16 %v89
    %v411 = vunpack.c.l.b16 %v90
    %v412 = vunpack.c.l.b16 %v91
    %v413 = vunpack.c.l.b16 %v92
    %v414 = vunpack.c.l.b16 %v93
    %v415 = vunpack.c.l.b16 %v94
    %v416 = vunpack.c.l.b16 %v95
    %v417 = vunpack.c.l.b16 %v96
    %v418 = vunpack.c.l.b16 %v97
    %v419 = vunpack.c.l.b16 %v98
    %v420 = vunpack.c.l.b16 %v99
    %v421 = vunpack.c.l.b16 %v100
    %v422 = vunpack.c.l.b16 %v101
    %v423 = vunpack.c.l.b16 %v102
    %v424 = vunpack.c.l.b16 %v103
    %v425 = vunpack.c.l.b16 %v104
    %v426 = vunpack.c.l.b16 %v105
    %v427 = vunpack.c.l.b16 %v106
    %v428 = vunpack.c.l.b16 %v107
    %v429 = vunpack.c.l.b16 %v108
    %v430 = vunpack.c.l.b16 %v109
    %v431 = vunpack.c.l.b16 %v110
    %v432 = vunpack.c.l.b16 %v111
    %v433 = vunpack.c.l.b16 %v112
    %v434 = vunpack.c.l.b16 %v113
    %v435 = vunpack.c.l.b16 %v114
    %v436 = vunpack.c.l.b16 %v115
    %v437 = vunpack.c.l.b16 %v116
    %v438 = vunpack.c.l.b16 %v117
    %v439 = vunpack.c.l.b16 %v118
    %v440 = vunpack.c.l.b16 %v119
    %v441 = vunpack.c.l.b16 %v120
    %v442 = vunpack.c.l.b16 %v121
    %v443 = vunpack.c.l.b16 %v122
    %v444 = vunpack.c.l.b16 %v123
    %v445 = vunpack.c.l.b16 %v124
    %v446 = vunpack.c.l.b16 %v125
    %v447 = vunpack.c.l.b16 %v126
    %v448 = vunpack.c.l.b16 %v127
    %v449 = vunpack.c.l.b16 %v128
    %v450 = vunpack.c.l.b16 %v129
    %v451 = vunpack.c.l.b16 %v130
    %v452 = vunpack.c.l.b16 %v131
    %v453 = vunpack.c.l.b16 %v132
    %v454 = vunpack.c.l.b16 %v133
    %v455 = vunpack.c.l.b16 %v134
    %v456 = vunpack.c.l.b16 %v135
    %v457 = vunpack.c.l.b16 %v136
    %v458 = vunpack.c.l.b16 %v137
    %v459 = vunpack.c.l.b16 %v138
    %v460 = vunpack.c.l.b16 %v139
    %v461 = vunpack.c.l.b16 %v140
    %v462 = vunpack.c.l.b16 %v141
    %v463 = vunpack.c.l.b16 %v142
    %v464 = vunpack.c.l.b16 %v143
    %v465 = vunpack.c.l.b16 %v144
    %v466 = vunpack.c.l.b16 %v145
    %v467 = vunpack.c.l.b16 %v146
    %v468 = vunpack.c.l.b16 %v147
    %v469 = vunpack.c.l.b16 %v148
    %v470 = vunpack.c.l.b16 %v149
    %v471 = vunpack.c.l.b16 %v150
    %v472 = vunpack.c.l.b16 %v151
    %v473 = vunpack.c.l.b16 %v152
    %v474 = vunpack.c.l.b16 %v153
    %v475 = vunpack.c.l.b16 %v154
    %v476 = vunpack.c.l.b16 %v155
    %v477 = vunpack.c.l.b16 %v156
    %v478 = vunpack.c.l.b16 %v157
    %v479 = vunpack.c.l.b16 %v158
    %v480 = vunpack.c.l.b16 %v159
    %v481 = vunpack.c.l.b16 %v160
    %v482 = vunpack.c.l.b16 %v161
    %v483 = vunpack.c.l.b16 %v162
    %v484 = vunpack.c.l.b16 %v163
    %v485 = vunpack.c.l.b16 %v164
    %v486 = vunpack.c.l.b16 %v165
    %v487 = vunpack.c.l.b16 %v166
    %v488 = vunpack.c.l.b16 %v167
    %v489 = vunpack.c.l.b16 %v168
    %v490 = vunpack.c.l.b16 %v169
    %v491 = vunpack.c.l.b16 %v170
    %v492 = vpack.c.b16 %v365, %v364
    %v493 = vpack.c.b16 %v367, %v366
    %v494 = vpack.c.b16 %v369, %v368
    %v495 = vpack.c.b16 %v371, %v370
    %v496 = vpack.c.b16 %v373, %v372
    %v497 = vpack.c.b16 %v375, %v374
    %v498 = vpack.c.b16 %v377, %v376
    %v499 = vpack.c.b16 %v379, %v378
    %v500 = vpack.c.b16 %v381, %v380
    %v501 = vpack.c.b16 %v383, %v382
    %v502 = vpack.c.b16 %v385, %v384
    %v503 = vpack.c.b16 %v387, %v386
    %v504 = vpack.c.b16 %v389, %v388
    %v505 = vpack.c.b16 %v391, %v390
    %v506 = vpack.c.b16 %v393, %v392
    %v507 = vpack.c.b16 %v395, %v394
    %v508 = vpack.c.b16 %v397, %v396
    %v509 = vpack.c.b16 %v399, %v398
    %v510 = vpack.c.b16 %v401, %v400
    %v511 = vpack.c.b16 %v403, %v402
    %v512 = vpack.c.b16 %v405, %v404
    %v513 = vpack.c.b16 %v407, %v406
    %v514 = vpack.c.b16 %v409, %v408
    %v515 = vpack.c.b16 %v411, %v410
    %v516 = vpack.c.b16 %v413, %v412
    %v517 = vpack.c.b16 %v415, %v414
    %v518 = vpack.c.b16 %v417, %v416
    %v519 = vpack.c.b16 %v419, %v418
    %v520 = vpack.c.b16 %v421, %v420
    %v521 = vpack.c.b16 %v423, %v422
    %v522 = vpack.c.b16 %v425, %v424
    %v523 = vpack.c.b16 %v427, %v426
    %v524 = vpack.c.b16 %v429, %v428
    %v525 = vpack.c.b16 %v431, %v430
    %v526 = vpack.c.b16 %v433, %v432
    %v527 = vpack.c.b16 %v435, %v434
    %v528 = vpack.c.b16 %v437, %v436
    %v529 = vpack.c.b16 %v439, %v438
    %v530 = vpack.c.b16 %v441, %v440
    %v531 = vpack.c.b16 %v443, %v442
    %v532 = vpack.c.b16 %v445, %v444
    %v533 = vpack.c.b16 %v447, %v446
    %v534 = vpack.c.b16 %v449, %v448
    %v535 = vpack.c.b16 %v451, %v450
    %v536 = vpack.c.b16 %v453, %v452
    %v537 = vpack.c.b16 %v455, %v454
    %v538 = vpack.c.b16 %v457, %v456
    %v539 = vpack.c.b16 %v459, %v458
    %v540 = vpack.c.b16 %v461, %v460
    %v541 = vpack.c.b16 %v463, %v462
    %v542 = vpack.c.b16 %v465, %v464
    %v543 = vpack.c.b16 %v467, %v466
    %v544 = vpack.c.b16 %v469, %v468
    %v545 = vpack.c.b16 %v471, %v470
    %v546 = vpack.c.b16 %v473, %v472
    %v547 = vpack.c.b16 %v475, %v474
    %v548 = vpack.c.b16 %v477, %v476
    %v549 = vpack.c.b16 %v479, %v478
    %v550 = vpack.c.b16 %v481, %v480
    %v551 = vpack.c.b16 %v483, %v482
    %v552 = vpack.c.b16 %v485, %v484
    %v553 = vpack.c.b16 %v487, %v486
    %v554 = vpack.c.b16 %v489, %v488
    %v555 = vpack.c.b16 %v491, %v490
    %620 = vmatprep.subr.bf16.mxu0 0
    %621 = vmatpush1.bf16.msra.mxu0 %v499
    %622 = vmatprep.subr.bf16.mxu0 0
    %623 = vmatpush1.bf16.msra.mxu0 %v498
    %624 = vmatprep.subr.bf16.mxu0 0
    %625 = vmatpush1.bf16.msra.mxu0 %v497
    %626 = vmatprep.subr.bf16.mxu0 0
    %627 = vmatpush1.bf16.msra.mxu0 %v496
    %628 = vmatprep.subr.bf16.mxu0 0
    %629 = vmatpush1.bf16.msra.mxu0 %v495
    %630 = vmatprep.subr.bf16.mxu0 0
    %631 = vmatpush1.bf16.msra.mxu0 %v494
    %632 = vmatprep.subr.bf16.mxu0 0
    %633 = vmatpush1.bf16.msra.mxu0 %v493
    %634 = vmatprep.subr.bf16.mxu0 0
    %635 = vmatpush1.bf16.msra.mxu0 %v492
    %636 = vmatprep.subr.bf16.mxu0 0
    %637 = vmatpush2.bf16.msra.mxu0 %v507
    %638 = vmatprep.subr.bf16.mxu0 0
    %639 = vmatpush2.bf16.msra.mxu0 %v506
    %640 = vmatprep.subr.bf16.mxu0 0
    %641 = vmatpush2.bf16.msra.mxu0 %v505
    %642 = vmatprep.subr.bf16.mxu0 0
    %643 = vmatpush2.bf16.msra.mxu0 %v504
    %644 = vmatprep.subr.bf16.mxu0 0
    %645 = vmatpush2.bf16.msra.mxu0 %v503
    %646 = vmatprep.subr.bf16.mxu0 0
    %647 = vmatpush2.bf16.msra.mxu0 %v502
    %648 = vmatprep.subr.bf16.mxu0 0
    %649 = vmatpush2.bf16.msra.mxu0 %v501
    %650 = vmatprep.subr.bf16.mxu0 0
    %651 = vmatpush2.bf16.msra.mxu0 %v500
    %652 = vmatprep.mubr.bf16.mxu0 %v216
    %653 = vmatmul.mubr.bf16.gmra.mxu0 %v202
    %v654 = vpop.f32.mrf.mxu0
    %v655 = vadd.f32 %v176, %v654
    %v656 = vpop.f32.mrf.mxu0
    %v657 = vpop.f32.mrf.mxu0
    %v658 = vpop.f32.mrf.mxu0
    %659 = vdwg.mxu0
    %660 = vmatprep.subr.bf16.mxu0 0
    %661 = vmatpush1.bf16.msra.mxu0 %v515
    %662 = vmatprep.subr.bf16.mxu0 0
    %663 = vmatpush1.bf16.msra.mxu0 %v514
    %664 = vmatprep.subr.bf16.mxu0 0
    %665 = vmatpush1.bf16.msra.mxu0 %v513
    %666 = vmatprep.subr.bf16.mxu0 0
    %667 = vmatpush1.bf16.msra.mxu0 %v512
    %668 = vmatprep.subr.bf16.mxu0 0
    %669 = vmatpush1.bf16.msra.mxu0 %v511
    %670 = vmatprep.subr.bf16.mxu0 0
    %671 = vmatpush1.bf16.msra.mxu0 %v510
    %672 = vmatprep.subr.bf16.mxu0 0
    %673 = vmatpush1.bf16.msra.mxu0 %v509
    %674 = vmatprep.subr.bf16.mxu0 0
    %675 = vmatpush1.bf16.msra.mxu0 %v508
    %676 = vmatprep.subr.bf16.mxu0 0
    %677 = vmatpush2.bf16.msra.mxu0 %v523
    %678 = vmatprep.subr.bf16.mxu0 0
    %679 = vmatpush2.bf16.msra.mxu0 %v522
    %680 = vmatprep.subr.bf16.mxu0 0
    %681 = vmatpush2.bf16.msra.mxu0 %v521
    %682 = vmatprep.subr.bf16.mxu0 0
    %683 = vmatpush2.bf16.msra.mxu0 %v520
    %684 = vmatprep.subr.bf16.mxu0 0
    %685 = vmatpush2.bf16.msra.mxu0 %v519
    %686 = vmatprep.subr.bf16.mxu0 0
    %687 = vmatpush2.bf16.msra.mxu0 %v518
    %688 = vmatprep.subr.bf16.mxu0 0
    %689 = vmatpush2.bf16.msra.mxu0 %v517
    %690 = vmatprep.subr.bf16.mxu0 0
    %691 = vmatpush2.bf16.msra.mxu0 %v516
    %692 = vmatprep.mubr.bf16.mxu0 %v226
    %693 = vmatmul.mubr.bf16.gmra.mxu0 %v224
    %v694 = vpop.f32.mrf.mxu0
    %v695 = vadd.f32 %v655, %v694
    %v696 = vpop.f32.mrf.mxu0
    %v697 = vpop.f32.mrf.mxu0
    %v698 = vpop.f32.mrf.mxu0
    %699 = vdwg.mxu0
    %700 = vmatprep.subr.bf16.mxu0 0
    %701 = vmatpush1.bf16.msra.mxu0 %v531
    %702 = vmatprep.subr.bf16.mxu0 0
    %703 = vmatpush1.bf16.msra.mxu0 %v530
    %704 = vmatprep.subr.bf16.mxu0 0
    %705 = vmatpush1.bf16.msra.mxu0 %v529
    %706 = vmatprep.subr.bf16.mxu0 0
    %707 = vmatpush1.bf16.msra.mxu0 %v528
    %708 = vmatprep.subr.bf16.mxu0 0
    %709 = vmatpush1.bf16.msra.mxu0 %v527
    %710 = vmatprep.subr.bf16.mxu0 0
    %711 = vmatpush1.bf16.msra.mxu0 %v526
    %712 = vmatprep.subr.bf16.mxu0 0
    %713 = vmatpush1.bf16.msra.mxu0 %v525
    %714 = vmatprep.subr.bf16.mxu0 0
    %715 = vmatpush1.bf16.msra.mxu0 %v524
    %716 = vmatprep.subr.bf16.mxu0 0
    %717 = vmatpush2.bf16.msra.mxu0 %v539
    %718 = vmatprep.subr.bf16.mxu0 0
    %719 = vmatpush2.bf16.msra.mxu0 %v538
    %720 = vmatprep.subr.bf16.mxu0 0
    %721 = vmatpush2.bf16.msra.mxu0 %v537
    %722 = vmatprep.subr.bf16.mxu0 0
    %723 = vmatpush2.bf16.msra.mxu0 %v536
    %724 = vmatprep.subr.bf16.mxu0 0
    %725 = vmatpush2.bf16.msra.mxu0 %v535
    %726 = vmatprep.subr.bf16.mxu0 0
    %727 = vmatpush2.bf16.msra.mxu0 %v534
    %728 = vmatprep.subr.bf16.mxu0 0
    %729 = vmatpush2.bf16.msra.mxu0 %v533
    %730 = vmatprep.subr.bf16.mxu0 0
    %731 = vmatpush2.bf16.msra.mxu0 %v532
    %732 = vmatprep.mubr.bf16.mxu0 %v223
    %733 = vmatmul.mubr.bf16.gmra.mxu0 %v209
    %v734 = vpop.f32.mrf.mxu0
    %v735 = vadd.f32 %v695, %v734
    %v736 = vpop.f32.mrf.mxu0
    %v737 = vpop.f32.mrf.mxu0
    %v738 = vpop.f32.mrf.mxu0
    %739 = vdwg.mxu0
    %740 = vmatprep.subr.bf16.mxu0 0
    %741 = vmatpush1.bf16.msra.mxu0 %v547
    %742 = vmatprep.subr.bf16.mxu0 0
    %743 = vmatpush1.bf16.msra.mxu0 %v546
    %744 = vmatprep.subr.bf16.mxu0 0
    %745 = vmatpush1.bf16.msra.mxu0 %v545
    %746 = vmatprep.subr.bf16.mxu0 0
    %747 = vmatpush1.bf16.msra.mxu0 %v544
    %748 = vmatprep.subr.bf16.mxu0 0
    %749 = vmatpush1.bf16.msra.mxu0 %v543
    %750 = vmatprep.subr.bf16.mxu0 0
    %751 = vmatpush1.bf16.msra.mxu0 %v542
    %752 = vmatprep.subr.bf16.mxu0 0
    %753 = vmatpush1.bf16.msra.mxu0 %v541
    %754 = vmatprep.subr.bf16.mxu0 0
    %755 = vmatpush1.bf16.msra.mxu0 %v540
    %756 = vmatprep.subr.bf16.mxu0 0
    %757 = vmatpush2.bf16.msra.mxu0 %v555
    %758 = vmatprep.subr.bf16.mxu0 0
    %759 = vmatpush2.bf16.msra.mxu0 %v554
    %760 = vmatprep.subr.bf16.mxu0 0
    %761 = vmatpush2.bf16.msra.mxu0 %v553
    %762 = vmatprep.subr.bf16.mxu0 0
    %763 = vmatpush2.bf16.msra.mxu0 %v552
    %764 = vmatprep.subr.bf16.mxu0 0
    %765 = vmatpush2.bf16.msra.mxu0 %v551
    %766 = vmatprep.subr.bf16.mxu0 0
    %767 = vmatpush2.bf16.msra.mxu0 %v550
    %768 = vmatprep.subr.bf16.mxu0 0
    %769 = vmatpush2.bf16.msra.mxu0 %v549
    %770 = vmatprep.subr.bf16.mxu0 0
    %771 = vmatpush2.bf16.msra.mxu0 %v548
    %772 = vmatprep.mubr.bf16.mxu0 %v227
    %773 = vmatmul.mubr.bf16.gmra.mxu0 %v225
    %v774 = vpop.f32.mrf.mxu0
    %v775 = vadd.f32 %v735, %v774
    %v776 = vpop.f32.mrf.mxu0
    %v777 = vpop.f32.mrf.mxu0
    %v778 = vpop.f32.mrf.mxu0
    %779 = vdwg.mxu0
    %v780 = vmax.f32 %v775, 0.0
    %v781 = vpack.c.bf16 %v780, %v780
    %v782 = vld [vmem:[%s3] sm:$0xf]
    %v783 = vld [vmem:[%s3 + $0x4] sm:$0xf]
    %v784 = vld [vmem:[%s3 + $0x8] sm:$0xf]
    %v785 = vld [vmem:[%s3 + $0xc] sm:$0xf]
    %v786 = vld [vmem:[%s3 + $0x10] sm:$0xf]
    %v787 = vld [vmem:[%s3 + $0x14] sm:$0xf]
    %v788 = vld [vmem:[%s3 + $0x18] sm:$0xf]
    %v789 = vld [vmem:[%s3 + $0x1c] sm:$0xf]
    %v790 = vld [vmem:[%s3 + $0x20] sm:$0xf]
    %v791 = vld [vmem:[%s3 + $0x24] sm:$0xf]
    %v792 = vld [vmem:[%s3 + $0x28] sm:$0xf]
    %v793 = vld [vmem:[%s3 + $0x2c] sm:$0xf]
    %v794 = vld [vmem:[%s3 + $0x30] sm:$0xf]
    %v795 = vld [vmem:[%s3 + $0x34] sm:$0xf]
    %v796 = vld [vmem:[%s3 + $0x38] sm:$0xf]
    %v797 = vld [vmem:[%s3 + $0x3c] sm:$0xf]
    %v798 = vld [vmem:[%s4] sm:$0x1]
    %v800 = vlaneseq
    %v801 = vshrl.u32 %v800, 7
    %v802 = vsub.s32 0, %v801
    %v803 = vrot.slane %v798, %v802
    %v821 = vunpack.c.l.b16 %v782
    %v822 = vunpack.c.l.b16 %v783
    %v823 = vunpack.c.l.b16 %v784
    %v824 = vunpack.c.l.b16 %v785
    %v825 = vunpack.c.l.b16 %v786
    %v826 = vunpack.c.l.b16 %v787
    %v827 = vunpack.c.l.b16 %v788
    %v828 = vunpack.c.l.b16 %v789
    %v829 = vunpack.c.l.b16 %v790
    %v830 = vunpack.c.l.b16 %v791
    %v831 = vunpack.c.l.b16 %v792
    %v832 = vunpack.c.l.b16 %v793
    %v833 = vunpack.c.l.b16 %v794
    %v834 = vunpack.c.l.b16 %v795
    %v835 = vunpack.c.l.b16 %v796
    %v836 = vunpack.c.l.b16 %v797
    %v837 = vpack.c.b16 %v822, %v821
    %v838 = vpack.c.b16 %v824, %v823
    %v839 = vpack.c.b16 %v826, %v825
    %v840 = vpack.c.b16 %v828, %v827
    %v841 = vpack.c.b16 %v830, %v829
    %v842 = vpack.c.b16 %v832, %v831
    %v843 = vpack.c.b16 %v834, %v833
    %v844 = vpack.c.b16 %v836, %v835
    %853 = vmatprep.subr.bf16.mxu0 0
    %854 = vmatpush1.bf16.msra.mxu0 %v844
    %855 = vmatprep.subr.bf16.mxu0 0
    %856 = vmatpush1.bf16.msra.mxu0 %v843
    %857 = vmatprep.subr.bf16.mxu0 0
    %858 = vmatpush1.bf16.msra.mxu0 %v842
    %859 = vmatprep.subr.bf16.mxu0 0
    %860 = vmatpush1.bf16.msra.mxu0 %v841
    %861 = vmatprep.subr.bf16.mxu0 0
    %862 = vmatpush1.bf16.msra.mxu0 %v840
    %863 = vmatprep.subr.bf16.mxu0 0
    %864 = vmatpush1.bf16.msra.mxu0 %v839
    %865 = vmatprep.subr.bf16.mxu0 0
    %866 = vmatpush1.bf16.msra.mxu0 %v838
    %867 = vmatprep.subr.bf16.mxu0 0
    %868 = vmatpush1.bf16.msra.mxu0 %v837
    %869 = vmatprep.subr.bf16.mxu0 0
    %870 = vmatpush2.bf16.msra.mxu0 0
    %871 = vmatprep.subr.bf16.mxu0 0
    %872 = vmatpush2.bf16.msra.mxu0 0
    %873 = vmatprep.subr.bf16.mxu0 0
    %874 = vmatpush2.bf16.msra.mxu0 0
    %875 = vmatprep.subr.bf16.mxu0 0
    %876 = vmatpush2.bf16.msra.mxu0 0
    %877 = vmatprep.subr.bf16.mxu0 0
    %878 = vmatpush2.bf16.msra.mxu0 0
    %879 = vmatprep.subr.bf16.mxu0 0
    %880 = vmatpush2.bf16.msra.mxu0 0
    %881 = vmatprep.subr.bf16.mxu0 0
    %882 = vmatpush2.bf16.msra.mxu0 0
    %883 = vmatprep.subr.bf16.mxu0 0
    %884 = vmatpush2.bf16.msra.mxu0 0
    %885 = vmatprep.mubr.bf16.mxu0 0
    %886 = vmatmul.mubr.bf16.gmra.mxu0 %v781
    %v887 = vpop.f32.mrf.mxu0
    %v888 = vadd.f32 %v803, %v887
    %v889 = vpop.f32.mrf.mxu0
    %v890 = vpop.f32.mrf.mxu0
    %v891 = vpop.f32.mrf.mxu0
    %892 = vdwg.mxu0
    %v893 = vmax.f32 %v888, 0.0
    %v894 = vpack.c.bf16 %v893, %v893
    %v895 = vld [vmem:[%s5] sm:$0xf]
    %v896 = vld [vmem:[%s5 + $0x4] sm:$0xf]
    %v897 = vld [vmem:[%s5 + $0x8] sm:$0xf]
    %v898 = vld [vmem:[%s5 + $0xc] sm:$0xf]
    %v899 = vld [vmem:[%s5 + $0x10] sm:$0xf]
    %v900 = vld [vmem:[%s5 + $0x14] sm:$0xf]
    %v901 = vld [vmem:[%s5 + $0x18] sm:$0xf]
    %v902 = vld [vmem:[%s5 + $0x1c] sm:$0xf]
    %v903 = vld [vmem:[%s5 + $0x20] sm:$0xf]
    %v904 = vld [vmem:[%s5 + $0x24] sm:$0xf]
    %v905 = vld [vmem:[%s5 + $0x28] sm:$0xf]
    %v906 = vld [vmem:[%s5 + $0x2c] sm:$0xf]
    %v907 = vld [vmem:[%s5 + $0x30] sm:$0xf]
    %v908 = vld [vmem:[%s5 + $0x34] sm:$0xf]
    %v909 = vld [vmem:[%s5 + $0x38] sm:$0xf]
    %v910 = vld [vmem:[%s5 + $0x3c] sm:$0xf]
    %v911 = vld [vmem:[%s6] sm:$0x1]
    %v913 = vlaneseq
    %v914 = vshrl.u32 %v913, 7
    %v915 = vsub.s32 0, %v914
    %v916 = vrot.slane %v911, %v915
    %v934 = vunpack.c.l.b16 %v895
    %v935 = vunpack.c.l.b16 %v896
    %v936 = vunpack.c.l.b16 %v897
    %v937 = vunpack.c.l.b16 %v898
    %v938 = vunpack.c.l.b16 %v899
    %v939 = vunpack.c.l.b16 %v900
    %v940 = vunpack.c.l.b16 %v901
    %v941 = vunpack.c.l.b16 %v902
    %v942 = vunpack.c.l.b16 %v903
    %v943 = vunpack.c.l.b16 %v904
    %v944 = vunpack.c.l.b16 %v905
    %v945 = vunpack.c.l.b16 %v906
    %v946 = vunpack.c.l.b16 %v907
    %v947 = vunpack.c.l.b16 %v908
    %v948 = vunpack.c.l.b16 %v909
    %v949 = vunpack.c.l.b16 %v910
    %v950 = vpack.c.b16 %v935, %v934
    %v951 = vpack.c.b16 %v937, %v936
    %v952 = vpack.c.b16 %v939, %v938
    %v953 = vpack.c.b16 %v941, %v940
    %v954 = vpack.c.b16 %v943, %v942
    %v955 = vpack.c.b16 %v945, %v944
    %v956 = vpack.c.b16 %v947, %v946
    %v957 = vpack.c.b16 %v949, %v948
    %966 = vmatprep.subr.bf16.mxu0 0
    %967 = vmatpush1.bf16.msra.mxu0 %v957
    %968 = vmatprep.subr.bf16.mxu0 0
    %969 = vmatpush1.bf16.msra.mxu0 %v956
    %970 = vmatprep.subr.bf16.mxu0 0
    %971 = vmatpush1.bf16.msra.mxu0 %v955
    %972 = vmatprep.subr.bf16.mxu0 0
    %973 = vmatpush1.bf16.msra.mxu0 %v954
    %974 = vmatprep.subr.bf16.mxu0 0
    %975 = vmatpush1.bf16.msra.mxu0 %v953
    %976 = vmatprep.subr.bf16.mxu0 0
    %977 = vmatpush1.bf16.msra.mxu0 %v952
    %978 = vmatprep.subr.bf16.mxu0 0
    %979 = vmatpush1.bf16.msra.mxu0 %v951
    %980 = vmatprep.subr.bf16.mxu0 0
    %981 = vmatpush1.bf16.msra.mxu0 %v950
    %982 = vmatprep.subr.bf16.mxu0 0
    %983 = vmatpush2.bf16.msra.mxu0 0
    %984 = vmatprep.subr.bf16.mxu0 0
    %985 = vmatpush2.bf16.msra.mxu0 0
    %986 = vmatprep.subr.bf16.mxu0 0
    %987 = vmatpush2.bf16.msra.mxu0 0
    %988 = vmatprep.subr.bf16.mxu0 0
    %989 = vmatpush2.bf16.msra.mxu0 0
    %990 = vmatprep.subr.bf16.mxu0 0
    %991 = vmatpush2.bf16.msra.mxu0 0
    %992 = vmatprep.subr.bf16.mxu0 0
    %993 = vmatpush2.bf16.msra.mxu0 0
    %994 = vmatprep.subr.bf16.mxu0 0
    %995 = vmatpush2.bf16.msra.mxu0 0
    %996 = vmatprep.subr.bf16.mxu0 0
    %997 = vmatpush2.bf16.msra.mxu0 0
    %998 = vmatprep.mubr.bf16.mxu0 0
    %999 = vmatmul.mubr.bf16.gmra.mxu0 %v894
    %v1000 = vpop.f32.mrf.mxu0
    %v1001 = vadd.f32 %v916, %v1000
    %v1002 = vpop.f32.mrf.mxu0
    %v1003 = vpop.f32.mrf.mxu0
    %v1004 = vpop.f32.mrf.mxu0
    %1005 = vdwg.mxu0
    %1006 = vst [vmem:[#allocation5] sm:$0x3] %v1001
    // Predicated region
    $region34: #{linearnet_forward.1} parent=1 // pred_check
      _
    $region35: #{linearnet_forward.1} parent=1 // pred_check_branch
      %1008 = sbr.rel (0) target = $region37
    $region36: #{linearnet_forward.1} parent=1 // pred_region
      %s1010 = ssub.s32 32, 32
      %1011 = vsyncadd [#allocation4], %s1010
      %s1013 = sshll.u32 [#allocation5], 4
      %s1014 = int_to_ptr.vmem [resolvable:$true] %s1013
      %1016 = dma.vmem_to_hbm [thread:$0]  %s1014, 32, %s7, [#allocation4]
    $region37: #{linearnet_forward.1} parent=1 // pred_fallthru
      _
    // Predicated region
    $region38: #{linearnet_forward.1} parent=1 // pred_check
      _
    $region39: #{linearnet_forward.1} parent=1 // pred_check_branch
      %1018 = sbr.rel (0) target = $region41
    $region40: #{linearnet_forward.1} parent=1 // pred_region
      %1019 = dma.done [#allocation4], 32
    $region41: #{linearnet_forward.1} parent=1 // pred_fallthru
      _
    %1020 = vsyncpa [#allocation3], 1
    %1021 = vsyncpa [#allocation4], 1

</llo_original>
